<compile_context>
chip_gen: v7x
topology: tpu7x:2x2x1
jax: 0.10.0
libtpu: 0.0.40
codegen_flags: <defaults>
</compile_context>

<pallas_src>
import jax
import jax.numpy as jnp
from jax.experimental import pallas as pl
from jax.experimental.pallas import tpu as pltpu

# dot_general dims: contract the node axis (dim 0) of both 2-D operands.
_CONTRACT_NODE = (((0,), (0,)), ((), ()))


def ew_conv_kernel(x_ref, d_ref, src_ref, dst_ref, w1_ref, b1_ref, wt_ref, wp_ref, bf_ref,
                   hwt_ref, hwp_ref, acc_ref):
    """EW_Conv over edge tiles + hoisted EE node-side contractions at the last tile."""
    t = pl.program_id(0)
    n_nodes = x_ref.shape[0]
    e_tile = d_ref.shape[-1]

    @pl.when(t == 0)
    def _init():
        acc_ref[...] = jnp.zeros(acc_ref.shape, acc_ref.dtype)

    src = src_ref[0]                      # [1, E_t] int32 (-1 on padded edges)
    dst = dst_ref[0]                      # [1, E_t] int32
    d = d_ref[0]                          # [1, E_t] f32

    nodes = jax.lax.broadcasted_iota(jnp.int32, (n_nodes, e_tile), 0)     # node id / sublane
    dst_oh = (nodes == dst).astype(jnp.float32)                           # [N, E_t]
    gather = jnp.where(nodes == src, 1.0 - d, 0.0) + dst_oh               # [N, E_t]

    # gcn_message as a gather matmul: m[e] = (1 - d_e) * x[src_e] + x[dst_e].
    m = jax.lax.dot_general(gather, x_ref[...], _CONTRACT_NODE,
                            preferred_element_type=jnp.float32)           # [E_t, F_in]
    # gcn_reduce as a scatter matmul (MXU segment-sum, no per-node loop).
    acc_ref[...] += jnp.dot(dst_oh, m, preferred_element_type=jnp.float32)  # [N, F_in]

    @pl.when(t == pl.num_programs(0) - 1)
    def _finalize():
        h1 = jnp.dot(acc_ref[...], w1_ref[...], preferred_element_type=jnp.float32) + b1_ref[...]
        h1 = jnp.maximum(h1, 0.0)                                          # [N, H]
        # Hoisted EE node-side contractions (theta has no bias here: msg adds it via hw_pb).
        hwt_ref[...] = jnp.dot(h1, wt_ref[...], preferred_element_type=jnp.float32)
        hwp_ref[...] = jnp.dot(h1, wp_ref[...], preferred_element_type=jnp.float32) + bf_ref[...]


def ee_conv_kernel(hwt_ref, hwp_ref, d_ref, src_ref, dst_ref, out_ref, acc_ref):
    """EE_Conv over edge tiles: msg = d * hw_t[src] + hw_pb[dst]; running per-node max;
    ReLU + mean_nodes at the last tile."""
    t = pl.program_id(0)
    n_nodes = hwt_ref.shape[0]
    e_tile = d_ref.shape[-1]
    neg_inf = jnp.float32(-jnp.inf)

    @pl.when(t == 0)
    def _init():
        acc_ref[...] = jnp.full(acc_ref.shape, neg_inf, acc_ref.dtype)

    src = src_ref[0]                      # [1, E_t]
    dst = dst_ref[0]                      # [1, E_t]
    d = d_ref[0]                          # [1, E_t]

    nodes = jax.lax.broadcasted_iota(jnp.int32, (n_nodes, e_tile), 0)
    src_oh_d = jnp.where(nodes == src, d, 0.0)                            # [N, E_t] (d-scaled)
    dst_oh = (nodes == dst).astype(jnp.float32)                           # [N, E_t]

    # Two gather matmuls against the resident node tables (H-contraction already hoisted).
    msg = (jax.lax.dot_general(src_oh_d, hwt_ref[...], _CONTRACT_NODE,
                               preferred_element_type=jnp.float32)
           + jax.lax.dot_general(dst_oh, hwp_ref[...], _CONTRACT_NODE,
                                 preferred_element_type=jnp.float32))     # [E_t, F_pad]

    # dst index per edge in sublane orientation (padded edges -> -1) via a tiny MXU matmul:
    # dst_col[e] = sum_v dst_oh[v, e] * (v + 1) - 1.
    node_ids = jax.lax.broadcasted_iota(jnp.int32, (n_nodes, 1), 0).astype(jnp.float32) + 1.0
    dst_col = jax.lax.dot_general(dst_oh, node_ids, _CONTRACT_NODE,
                                  preferred_element_type=jnp.float32) - 1.0  # [E_t, 1]
    dst_idx = dst_col.astype(jnp.int32)

    # max_reduce: per-node masked sublane reduce + in-place row update (no loop carry,
    # no O(N^2 * F) selects).  TODO(synk): for graphs with thousands of nodes switch to a
    # scalar-prefetch row gather / node-tiled formulation instead of [N, E_t] one-hots.
    def scatter_max(v, carry):
        row = jnp.max(jnp.where(dst_idx == v, msg, neg_inf), axis=0, keepdims=True)  # [1, F_pad]
        acc_ref[pl.ds(v, 1), :] = jnp.maximum(acc_ref[pl.ds(v, 1), :], row)
        return carry

    jax.lax.fori_loop(0, n_nodes, scatter_max, 0)

    @pl.when(t == pl.num_programs(0) - 1)
    def _finalize():
        h_nodes = jnp.maximum(acc_ref[...], 0.0)                          # activation (ReLU)
        out_ref[...] = jnp.mean(h_nodes, axis=0, keepdims=True)           # mean_nodes -> [1, F_pad]


def eegcn_forward(x, d, src, dst, w1, b1, w_theta, b_theta, w_phi, b_phi, *, edge_tile=1024):
    """Full EEGCN forward for a single graph; returns [1, out_feats].

    Linear weights are stored as [in, out] (i.e. PyTorch weight.T), so linears are x @ W + b.
    """
    n_nodes, f_in = x.shape
    n_edges = int(d.shape[0])
    hidden = w1.shape[1]
    f_out = w_theta.shape[1]

    # Clamp edge_tile so tiny graphs run in a single grid step (per-step overhead dominates),
    # while keeping the lane dim a multiple of 128 when possible.
    edge_tile = max(8, min(edge_tile, ((n_edges + 127) // 128) * 128))
    num_tiles = pl.cdiv(n_edges, edge_tile)
    e_pad = num_tiles * edge_tile

    def tile_edges(a, fill):
        a = jnp.pad(a, (0, e_pad - n_edges), constant_values=fill)
        return a.reshape(num_tiles, 1, edge_tile)

    # Lane-dense edge streams.  Padded edges use src/dst = -1 (never matches a node id,
    # so their one-hot columns are all-zero) and d = 0.
    src_t = tile_edges(src.astype(jnp.int32), -1)
    dst_t = tile_edges(dst.astype(jnp.int32), -1)
    d_t = tile_edges(d.astype(jnp.float32), 0.0)

    # EE output features zero-padded to a 128-lane multiple (lane-dense stores); the zero
    # weight/bias padding keeps padded lanes at exactly 0 and they are sliced off below.
    f_pad = ((f_out + 127) // 128) * 128
    wt_p = jnp.pad(w_theta.astype(jnp.float32), ((0, 0), (0, f_pad - f_out)))
    wp_p = jnp.pad(w_phi.astype(jnp.float32), ((0, 0), (0, f_pad - f_out)))
    bf_p = jnp.pad((b_theta + b_phi).reshape(1, f_out).astype(jnp.float32),
                   ((0, 0), (0, f_pad - f_out)))

    edge_spec = lambda: pl.BlockSpec((1, 1, edge_tile), lambda t: (t, 0, 0))
    full_spec = lambda shape: pl.BlockSpec(shape, lambda t: (0, 0))
    params = pltpu.CompilerParams(
        dimension_semantics=("arbitrary",),           # single reduction axis over edge tiles
        vmem_limit_bytes=32 * 1024 * 1024,            # safe on v5e/v6e (128 MiB) and v7x (64 MiB)
    )

    # ---- EW_Conv (+ hoisted EE node-side contractions): x [N, F_in] -> hw_t, hw_pb [N, F_pad]
    hwt, hwpb = pl.pallas_call(
        ew_conv_kernel,
        out_shape=(jax.ShapeDtypeStruct((n_nodes, f_pad), jnp.float32),
                   jax.ShapeDtypeStruct((n_nodes, f_pad), jnp.float32)),
        grid=(num_tiles,),
        in_specs=[full_spec((n_nodes, f_in)), edge_spec(), edge_spec(), edge_spec(),
                  full_spec((f_in, hidden)), full_spec((1, hidden)),
                  full_spec((hidden, f_pad)), full_spec((hidden, f_pad)),
                  full_spec((1, f_pad))],
        out_specs=(full_spec((n_nodes, f_pad)), full_spec((n_nodes, f_pad))),
        scratch_shapes=[pltpu.VMEM((n_nodes, f_in), jnp.float32)],
        compiler_params=params,
    )(x.astype(jnp.float32), d_t, src_t, dst_t,
      w1.astype(jnp.float32), b1.reshape(1, hidden).astype(jnp.float32),
      wt_p, wp_p, bf_p)

    # ---- EE_Conv edge loop: gather + per-node max + ReLU + mean_nodes -> [1, F_pad]
    out = pl.pallas_call(
        ee_conv_kernel,
        out_shape=jax.ShapeDtypeStruct((1, f_pad), jnp.float32),
        grid=(num_tiles,),
        in_specs=[full_spec((n_nodes, f_pad)), full_spec((n_nodes, f_pad)),
                  edge_spec(), edge_spec(), edge_spec()],
        out_specs=full_spec((1, f_pad)),
        scratch_shapes=[pltpu.VMEM((n_nodes, f_pad), jnp.float32)],
        compiler_params=params,
    )(hwt, hwpb, d_t, src_t, dst_t)

    # TODO(synk): nn.Dropout(0.5) is the identity in eval mode; training-mode dropout
    # (random mask + 2x scale) is not implemented here.
    return out[:, :f_out]


def eegcn_reference(x, d, src, dst, w1, b1, w_theta, b_theta, w_phi, b_phi):
    n_nodes, f_in = x.shape
    f_out = w_theta.shape[1]
    # EW_Conv
    m = x[src] * (1.0 - d)[:, None] + x[dst]
    agg = jnp.zeros((n_nodes, f_in), jnp.float32).at[dst].add(m)
    h1 = jnp.maximum(agg @ w1 + b1, 0.0)
    # EE_Conv (activation=relu)
    e = (h1[src] * d[:, None]) @ w_theta + b_theta + h1[dst] @ w_phi + b_phi
    h = jnp.full((n_nodes, f_out), -jnp.inf, jnp.float32).at[dst].max(e)
    h = jnp.maximum(h, 0.0)
    return jnp.mean(h, axis=0, keepdims=True)


if __name__ == "__main__":
    key = jax.random.PRNGKey(0)
    n_nodes, n_edges = 8, 20                 # small graph; every node appears as a destination
    in_feats, hidden, out_feats = 16, 32, 32

    k = jax.random.split(key, 8)
    x = jax.random.normal(k[0], (n_nodes, in_feats), dtype=jnp.float32)   # node features
    d = jax.random.uniform(k[1], (n_edges,), dtype=jnp.float32)           # per-edge scalars

    # Deterministic graph with in-degree >= 1 for every node (allow_zero_in_degree=False).
    dst = jnp.arange(n_edges, dtype=jnp.int32) % n_nodes
    src = (jnp.arange(n_edges, dtype=jnp.int32) * 3 + 1) % n_nodes

    # Linear parameters stored as [in, out] (i.e. PyTorch weight.T), deterministic init.
    w1 = jax.random.normal(k[2], (in_feats, hidden), dtype=jnp.float32) * 0.1
    b1 = jax.random.normal(k[3], (hidden,), dtype=jnp.float32) * 0.1
    w_theta = jax.random.normal(k[4], (hidden, out_feats), dtype=jnp.float32) * 0.1
    b_theta = jax.random.normal(k[5], (out_feats,), dtype=jnp.float32) * 0.1
    w_phi = jax.random.normal(k[6], (hidden, out_feats), dtype=jnp.float32) * 0.1
    b_phi = jax.random.normal(k[7], (out_feats,), dtype=jnp.float32) * 0.1

    ref = eegcn_reference(x, d, src, dst, w1, b1, w_theta, b_theta, w_phi, b_phi)

    # Default path: edge_tile clamps so this tiny graph runs in a single grid step.
    out = eegcn_forward(x, d, src, dst, w1, b1, w_theta, b_theta, w_phi, b_phi)
    out = jax.block_until_ready(out)
    assert out.shape == (1, out_feats), out.shape
    assert jnp.allclose(out, ref, atol=1e-4, rtol=1e-4), (out, ref)

    # Multi-tile path: edge_tile=8 -> 3 grid steps, exercising the cross-tile accumulators
    # and padded-edge (-1 index / d=0) handling.
    out_mt = eegcn_forward(x, d, src, dst, w1, b1, w_theta, b_theta, w_phi, b_phi, edge_tile=8)
    out_mt = jax.block_until_ready(out_mt)
    assert jnp.allclose(out_mt, ref, atol=1e-4, rtol=1e-4), (out_mt, ref)

    print("KERNEL_OK")
</pallas_src>

<mosaic_0001>
module attributes {stable_mosaic.version = 11 : i64} {
  func.func @ew_conv_kernel(%arg0: i32, %arg1: memref<8x16xf32, #tpu.memory_space<vmem>>, %arg2: memref<1x1x128xf32, #tpu.memory_space<vmem>>, %arg3: memref<1x1x128xi32, #tpu.memory_space<vmem>>, %arg4: memref<1x1x128xi32, #tpu.memory_space<vmem>>, %arg5: memref<16x32xf32, #tpu.memory_space<vmem>>, %arg6: memref<1x32xf32, #tpu.memory_space<vmem>>, %arg7: memref<32x128xf32, #tpu.memory_space<vmem>>, %arg8: memref<32x128xf32, #tpu.memory_space<vmem>>, %arg9: memref<1x128xf32, #tpu.memory_space<vmem>>, %arg10: memref<8x128xf32, #tpu.memory_space<vmem>>, %arg11: memref<8x128xf32, #tpu.memory_space<vmem>>, %arg12: memref<8x16xf32, #tpu.memory_space<vmem>>) attributes {dimension_semantics = [#tpu.dimension_semantics<arbitrary>], iteration_bounds = array<i64: 1>, scalar_prefetch = 0 : i64, scratch_operands = 1 : i64, tpu.core_type = #tpu.core_type<tc>, window_params = [{pipeline_mode = #tpu.pipeline_mode<synchronous>, transform_indices = @transform_0, window_bounds = array<i64: 8, 16>}, {transform_indices = @transform_1, window_bounds = array<i64: 1, 1, 128>}, {transform_indices = @transform_2, window_bounds = array<i64: 1, 1, 128>}, {transform_indices = @transform_3, window_bounds = array<i64: 1, 1, 128>}, {pipeline_mode = #tpu.pipeline_mode<synchronous>, transform_indices = @transform_4, window_bounds = array<i64: 16, 32>}, {pipeline_mode = #tpu.pipeline_mode<synchronous>, transform_indices = @transform_5, window_bounds = array<i64: 1, 32>}, {pipeline_mode = #tpu.pipeline_mode<synchronous>, transform_indices = @transform_6, window_bounds = array<i64: 32, 128>}, {pipeline_mode = #tpu.pipeline_mode<synchronous>, transform_indices = @transform_7, window_bounds = array<i64: 32, 128>}, {pipeline_mode = #tpu.pipeline_mode<synchronous>, transform_indices = @transform_8, window_bounds = array<i64: 1, 128>}, {pipeline_mode = #tpu.pipeline_mode<synchronous>, transform_indices = @transform_9, window_bounds = array<i64: 8, 128>}, {pipeline_mode = #tpu.pipeline_mode<synchronous>, transform_indices = @transform_10, window_bounds = array<i64: 8, 128>}]} {
    %c0_i32 = arith.constant 0 : i32
    %0 = arith.cmpi eq, %arg0, %c0_i32 : i32
    %1 = arith.extui %0 : i1 to i32
    %c0_i32_0 = arith.constant 0 : i32
    %2 = arith.cmpi ne, %1, %c0_i32_0 : i32
    scf.if %2 {
      %cst_20 = arith.constant 0.000000e+00 : f32
      %32 = vector.broadcast %cst_20 : f32 to vector<8x16xf32>
      %c0_21 = arith.constant 0 : index
      %c0_22 = arith.constant 0 : index
      %33 = vector.load %arg12[%c0_21, %c0_22] : memref<8x16xf32, #tpu.memory_space<vmem>>, vector<8x16xf32>
      tpu.vector_store %arg12[%c0_21, %c0_22], %32 {strides = array<i32>} : memref<8x16xf32, #tpu.memory_space<vmem>>, vector<8x16xf32>,
    } else {
    }
    %c0 = arith.constant 0 : index
    %c0_1 = arith.constant 0 : index
    %c0_2 = arith.constant 0 : index
    %3 = vector.load %arg3[%c0, %c0_1, %c0_2] : memref<1x1x128xi32, #tpu.memory_space<vmem>>, vector<1x1x128xi32>
    %4 = vector.shape_cast %3 : vector<1x1x128xi32> to vector<1x128xi32>
    %c0_3 = arith.constant 0 : index
    %c0_4 = arith.constant 0 : index
    %c0_5 = arith.constant 0 : index
    %5 = vector.load %arg4[%c0_3, %c0_4, %c0_5] : memref<1x1x128xi32, #tpu.memory_space<vmem>>, vector<1x1x128xi32>
    %6 = vector.shape_cast %5 : vector<1x1x128xi32> to vector<1x128xi32>
    %c0_6 = arith.constant 0 : index
    %c0_7 = arith.constant 0 : index
    %c0_8 = arith.constant 0 : index
    %7 = vector.load %arg2[%c0_6, %c0_7, %c0_8] : memref<1x1x128xf32, #tpu.memory_space<vmem>>, vector<1x1x128xf32>
    %8 = vector.shape_cast %7 : vector<1x1x128xf32> to vector<1x128xf32>
    %9 = tpu.iota {dimensions = array<i32: 0>} : vector<8x128xi32>
    %10 = vector.broadcast %6 : vector<1x128xi32> to vector<8x128xi32>
    %11 = arith.cmpi eq, %9, %10 : vector<8x128xi32>
    %12 = arith.extui %11 : vector<8x128xi1> to vector<8x128xi32>
    %13 = arith.sitofp %12 : vector<8x128xi32> to vector<8x128xf32>
    %14 = vector.broadcast %4 : vector<1x128xi32> to vector<8x128xi32>
    %15 = arith.cmpi eq, %9, %14 : vector<8x128xi32>
    %cst = arith.constant 1.000000e+00 : f32
    %16 = vector.broadcast %cst : f32 to vector<1x128xf32>
    %17 = arith.subf %16, %8 : vector<1x128xf32>
    %cst_9 = arith.constant 0.000000e+00 : f32
    %18 = vector.shape_cast %17 : vector<1x128xf32> to vector<1x128xf32>
    %19 = vector.broadcast %18 : vector<1x128xf32> to vector<8x128xf32>
    %20 = vector.broadcast %cst_9 : f32 to vector<8x128xf32>
    %21 = arith.select %15, %19, %20 : vector<8x128xi1>, vector<8x128xf32>
    %22 = arith.addf %21, %13 : vector<8x128xf32>
    %c0_10 = arith.constant 0 : index
    %c0_11 = arith.constant 0 : index
    %23 = vector.load %arg1[%c0_10, %c0_11] : memref<8x16xf32, #tpu.memory_space<vmem>>, vector<8x16xf32>
    %cst_12 = arith.constant dense<0.000000e+00> : vector<128x16xf32>
    %24 = tpu.matmul %22, %23, %cst_12 {dimension_numbers = #tpu.dot_dimension_numbers<[0], [0], [1], [1], [0, 1, 1, 1], [], []>} : vector<8x128xf32>, vector<8x16xf32>, vector<128x16xf32> -> vector<128x16xf32>
    %c0_13 = arith.constant 0 : index
    %c0_14 = arith.constant 0 : index
    %25 = vector.load %arg12[%c0_13, %c0_14] : memref<8x16xf32, #tpu.memory_space<vmem>>, vector<8x16xf32>
    %cst_15 = arith.constant dense<0.000000e+00> : vector<8x16xf32>
    %26 = tpu.matmul %13, %24, %cst_15 {dimension_numbers = #tpu.dot_dimension_numbers<[1], [0], [0], [1], [0, 0, 1, 1], [], []>} : vector<8x128xf32>, vector<128x16xf32>, vector<8x16xf32> -> vector<8x16xf32>
    %27 = arith.addf %25, %26 : vector<8x16xf32>
    %c0_16 = arith.constant 0 : index
    %c0_17 = arith.constant 0 : index
    %28 = vector.load %arg12[%c0_16, %c0_17] : memref<8x16xf32, #tpu.memory_space<vmem>>, vector<8x16xf32>
    tpu.vector_store %arg12[%c0_16, %c0_17], %27 {strides = array<i32>} : memref<8x16xf32, #tpu.memory_space<vmem>>, vector<8x16xf32>,
    %c0_i32_18 = arith.constant 0 : i32
    %29 = arith.cmpi eq, %arg0, %c0_i32_18 : i32
    %30 = arith.extui %29 : i1 to i32
    %c0_i32_19 = arith.constant 0 : i32
    %31 = arith.cmpi ne, %30, %c0_i32_19 : i32
    scf.if %31 {
      %c0_20 = arith.constant 0 : index
      %c0_21 = arith.constant 0 : index
      %32 = vector.load %arg12[%c0_20, %c0_21] : memref<8x16xf32, #tpu.memory_space<vmem>>, vector<8x16xf32>
      %c0_22 = arith.constant 0 : index
      %c0_23 = arith.constant 0 : index
      %33 = vector.load %arg5[%c0_22, %c0_23] : memref<16x32xf32, #tpu.memory_space<vmem>>, vector<16x32xf32>
      %cst_24 = arith.constant dense<0.000000e+00> : vector<8x32xf32>
      %34 = tpu.matmul %32, %33, %cst_24 {dimension_numbers = #tpu.dot_dimension_numbers<[1], [0], [0], [1], [0, 0, 1, 1], [], []>} : vector<8x16xf32>, vector<16x32xf32>, vector<8x32xf32> -> vector<8x32xf32>
      %c0_25 = arith.constant 0 : index
      %c0_26 = arith.constant 0 : index
      %35 = vector.load %arg6[%c0_25, %c0_26] : memref<1x32xf32, #tpu.memory_space<vmem>>, vector<1x32xf32>
      %36 = vector.broadcast %35 : vector<1x32xf32> to vector<8x32xf32>
      %37 = arith.addf %34, %36 : vector<8x32xf32>
      %cst_27 = arith.constant 0.000000e+00 : f32
      %38 = vector.broadcast %cst_27 : f32 to vector<8x32xf32>
      %39 = arith.maximumf %37, %38 : vector<8x32xf32>
      %c0_28 = arith.constant 0 : index
      %c0_29 = arith.constant 0 : index
      %40 = vector.load %arg7[%c0_28, %c0_29] : memref<32x128xf32, #tpu.memory_space<vmem>>, vector<32x128xf32>
      %cst_30 = arith.constant dense<0.000000e+00> : vector<8x128xf32>
      %41 = tpu.matmul %39, %40, %cst_30 {dimension_numbers = #tpu.dot_dimension_numbers<[1], [0], [0], [1], [0, 0, 1, 1], [], []>} : vector<8x32xf32>, vector<32x128xf32>, vector<8x128xf32> -> vector<8x128xf32>
      %c0_31 = arith.constant 0 : index
      %c0_32 = arith.constant 0 : index
      %42 = vector.load %arg10[%c0_31, %c0_32] : memref<8x128xf32, #tpu.memory_space<vmem>>, vector<8x128xf32>
      tpu.vector_store %arg10[%c0_31, %c0_32], %41 {strides = array<i32>} : memref<8x128xf32, #tpu.memory_space<vmem>>, vector<8x128xf32>,
      %c0_33 = arith.constant 0 : index
      %c0_34 = arith.constant 0 : index
      %43 = vector.load %arg8[%c0_33, %c0_34] : memref<32x128xf32, #tpu.memory_space<vmem>>, vector<32x128xf32>
      %cst_35 = arith.constant dense<0.000000e+00> : vector<8x128xf32>
      %44 = tpu.matmul %39, %43, %cst_35 {dimension_numbers = #tpu.dot_dimension_numbers<[1], [0], [0], [1], [0, 0, 1, 1], [], []>} : vector<8x32xf32>, vector<32x128xf32>, vector<8x128xf32> -> vector<8x128xf32>
      %c0_36 = arith.constant 0 : index
      %c0_37 = arith.constant 0 : index
      %45 = vector.load %arg9[%c0_36, %c0_37] : memref<1x128xf32, #tpu.memory_space<vmem>>, vector<1x128xf32>
      %46 = vector.broadcast %45 : vector<1x128xf32> to vector<8x128xf32>
      %47 = arith.addf %44, %46 : vector<8x128xf32>
      %c0_38 = arith.constant 0 : index
      %c0_39 = arith.constant 0 : index
      %48 = vector.load %arg11[%c0_38, %c0_39] : memref<8x128xf32, #tpu.memory_space<vmem>>, vector<8x128xf32>
      tpu.vector_store %arg11[%c0_38, %c0_39], %47 {strides = array<i32>} : memref<8x128xf32, #tpu.memory_space<vmem>>, vector<8x128xf32>,
    } else {
    }
    return
  }
  func.func @transform_0(%arg0: i32) -> (i32, i32) {
    %c0_i32 = arith.constant 0 : i32
    %c0_i32_0 = arith.constant 0 : i32
    %c0_i32_1 = arith.constant 0 : i32
    return %c0_i32, %c0_i32_0 : i32, i32
  }
  func.func @transform_1(%arg0: i32) -> (i32, i32, i32) {
    %c0_i32 = arith.constant 0 : i32
    %c0_i32_0 = arith.constant 0 : i32
    %c0_i32_1 = arith.constant 0 : i32
    return %arg0, %c0_i32, %c0_i32_0 : i32, i32, i32
  }
  func.func @transform_2(%arg0: i32) -> (i32, i32, i32) {
    %c0_i32 = arith.constant 0 : i32
    %c0_i32_0 = arith.constant 0 : i32
    %c0_i32_1 = arith.constant 0 : i32
    return %arg0, %c0_i32, %c0_i32_0 : i32, i32, i32
  }
  func.func @transform_3(%arg0: i32) -> (i32, i32, i32) {
    %c0_i32 = arith.constant 0 : i32
    %c0_i32_0 = arith.constant 0 : i32
    %c0_i32_1 = arith.constant 0 : i32
    return %arg0, %c0_i32, %c0_i32_0 : i32, i32, i32
  }
  func.func @transform_4(%arg0: i32) -> (i32, i32) {
    %c0_i32 = arith.constant 0 : i32
    %c0_i32_0 = arith.constant 0 : i32
    %c0_i32_1 = arith.constant 0 : i32
    return %c0_i32, %c0_i32_0 : i32, i32
  }
  func.func @transform_5(%arg0: i32) -> (i32, i32) {
    %c0_i32 = arith.constant 0 : i32
    %c0_i32_0 = arith.constant 0 : i32
    %c0_i32_1 = arith.constant 0 : i32
    return %c0_i32, %c0_i32_0 : i32, i32
  }
  func.func @transform_6(%arg0: i32) -> (i32, i32) {
    %c0_i32 = arith.constant 0 : i32
    %c0_i32_0 = arith.constant 0 : i32
    %c0_i32_1 = arith.constant 0 : i32
    return %c0_i32, %c0_i32_0 : i32, i32
  }
  func.func @transform_7(%arg0: i32) -> (i32, i32) {
    %c0_i32 = arith.constant 0 : i32
    %c0_i32_0 = arith.constant 0 : i32
    %c0_i32_1 = arith.constant 0 : i32
    return %c0_i32, %c0_i32_0 : i32, i32
  }
  func.func @transform_8(%arg0: i32) -> (i32, i32) {
    %c0_i32 = arith.constant 0 : i32
    %c0_i32_0 = arith.constant 0 : i32
    %c0_i32_1 = arith.constant 0 : i32
    return %c0_i32, %c0_i32_0 : i32, i32
  }
  func.func @transform_9(%arg0: i32) -> (i32, i32) {
    %c0_i32 = arith.constant 0 : i32
    %c0_i32_0 = arith.constant 0 : i32
    %c0_i32_1 = arith.constant 0 : i32
    return %c0_i32, %c0_i32_0 : i32, i32
  }
  func.func @transform_10(%arg0: i32) -> (i32, i32) {
    %c0_i32 = arith.constant 0 : i32
    %c0_i32_0 = arith.constant 0 : i32
    %c0_i32_1 = arith.constant 0 : i32
    return %c0_i32, %c0_i32_0 : i32, i32
  }
}

</mosaic_0001>

<llo_original>
// kernel: tpu_custom_call.1
$region0: #{tpu_custom_call.1}
  #allocation0 [shape = 'u32[]', space=smem, size = 0x4, offset = 0x4, fixed_abs, tag = 'smem constant byte address 0x4 - core index']
  #allocation1 [shape = 'u32[144,128]{1,0:T(1,128)}', space=vmem, size = 0x12000, scoped, tag = 'internal scratch']
  #allocation2 [shape = 'f32[8,16]{1,0:T(8,128)}', space=vmem, size = 0x1000, scoped, tag = 'scratch operand']
  %s0 = inlined_call_operand.hbm [shape: f32[8,16], index: 0, kind: input, shape index: {}]
  %s1 = inlined_call_operand.vmem [shape: f32[1,1,128], index: 1, kind: input, shape index: {}]
  %s2 = inlined_call_operand.vmem [shape: s32[1,1,128], index: 2, kind: input, shape index: {}]
  %s3 = inlined_call_operand.vmem [shape: s32[1,1,128], index: 3, kind: input, shape index: {}]
  %s4 = inlined_call_operand.hbm [shape: f32[16,32], index: 4, kind: input, shape index: {}]
  %s5 = inlined_call_operand.vmem [shape: f32[1,32], index: 5, kind: input, shape index: {}]
  %s6 = inlined_call_operand.hbm [shape: f32[32,128], index: 6, kind: input, shape index: {}]
  %s7 = inlined_call_operand.hbm [shape: f32[32,128], index: 7, kind: input, shape index: {}]
  %s8 = inlined_call_operand.vmem [shape: f32[1,128], index: 8, kind: input, shape index: {}]
  %s9 = inlined_call_operand.hbm [shape: f32[8,128], index: 9, kind: output, shape index: {0}]
  %s10 = inlined_call_operand.hbm [shape: f32[8,128], index: 10, kind: output, shape index: {1}]
  %11 = xla_tuple %s9, %s10
  %s12 = sld [smem:[#allocation0]]
  $region78: #{tpu_custom_call.1} parent=0
    _
  %s14 = ssub.s32 1, %s12
  %s15 = scalar_select 0, %s14, %s12
  $region1: #{tpu_custom_call.1} parent=0
    #allocation3 [shape = 'u8[4096]{0}', space=vmem, size = 0x1000, scoped, tag = 'input window, operand 0, single buffered']
    #allocation4 [shape = 's32[1]{0}', space=sflag, size = 0x4, scoped, tag = 'scoped memory for tpu_custom_call.1']
    #allocation5 [shape = 's32[1]{0}', space=sflag, size = 0x4, scoped, tag = 'scoped memory for tpu_custom_call.1']
    #allocation6 [shape = 'u8[8192]{0}', space=vmem, size = 0x2000, scoped, tag = 'input window, operand 4, single buffered']
    #allocation7 [shape = 's32[1]{0}', space=sflag, size = 0x4, scoped, tag = 'scoped memory for tpu_custom_call.1']
    #allocation8 [shape = 'u8[16384]{0}', space=vmem, size = 0x4000, scoped, tag = 'input window, operand 6, single buffered']
    #allocation9 [shape = 'u8[16384]{0}', space=vmem, size = 0x4000, scoped, tag = 'input window, operand 7, single buffered']
    #allocation10 [shape = 's32[1]{0}', space=sflag, size = 0x4, scoped, tag = 'scoped memory for tpu_custom_call.1']
    #allocation11 [shape = 'u8[4096]{0}', space=vmem, size = 0x1000, scoped, tag = 'output window, operand 0, single buffered']
    #allocation12 [shape = 'u8[4096]{0}', space=vmem, size = 0x1000, scoped, tag = 'output window, operand 1, single buffered']
    #allocation13 [shape = 's32[1]{0}', space=sflag, size = 0x4, scoped, tag = 'scoped memory for tpu_custom_call.1']
    %16 = vsyncpa [#allocation4], 0
    %17 = vsyncpa [#allocation7], 0
    %18 = vsyncpa [#allocation10], 0
    %19 = vsyncpa [#allocation5], 0
    %20 = vsyncpa [#allocation13], 0
    // Predicated region
    $region2: #{tpu_custom_call.1} parent=1 // pred_check
      _
    $region3: #{tpu_custom_call.1} parent=1 // pred_check_branch
      %22 = sbr.rel (0) target = $region5
    $region4: #{tpu_custom_call.1} parent=1 // pred_region
      %s24 = ssub.s32 128, 128
      %25 = vsyncadd [#allocation4], %s24
      %s27 = sshll.u32 [#allocation3], 4
      %s28 = int_to_ptr.vmem [resolvable:$true] %s27
      %30 = dma.hbm_to_vmem [thread:$0]  %s0, 128, %s28, [#allocation4]
    $region5: #{tpu_custom_call.1} parent=1 // pred_fallthru
      _
    // Predicated region
    $region6: #{tpu_custom_call.1} parent=1 // pred_check
      _
    $region7: #{tpu_custom_call.1} parent=1 // pred_check_branch
      %32 = sbr.rel (0) target = $region9
    $region8: #{tpu_custom_call.1} parent=1 // pred_region
      _
    $region9: #{tpu_custom_call.1} parent=1 // pred_fallthru
      _
    // Predicated region
    $region10: #{tpu_custom_call.1} parent=1 // pred_check
      _
    $region11: #{tpu_custom_call.1} parent=1 // pred_check_branch
      %34 = sbr.rel (0) target = $region13
    $region12: #{tpu_custom_call.1} parent=1 // pred_region
      _
    $region13: #{tpu_custom_call.1} parent=1 // pred_fallthru
      _
    // Predicated region
    $region14: #{tpu_custom_call.1} parent=1 // pred_check
      _
    $region15: #{tpu_custom_call.1} parent=1 // pred_check_branch
      %36 = sbr.rel (0) target = $region17
    $region16: #{tpu_custom_call.1} parent=1 // pred_region
      _
    $region17: #{tpu_custom_call.1} parent=1 // pred_fallthru
      _
    // Predicated region
    $region18: #{tpu_custom_call.1} parent=1 // pred_check
      _
    $region19: #{tpu_custom_call.1} parent=1 // pred_check_branch
      %38 = sbr.rel (0) target = $region21
    $region20: #{tpu_custom_call.1} parent=1 // pred_region
      %s40 = ssub.s32 256, 256
      %41 = vsyncadd [#allocation7], %s40
      %s42 = sshll.u32 [#allocation6], 4
      %s43 = int_to_ptr.vmem [resolvable:$true] %s42
      %48 = dma.hbm_to_vmem [thread:$0]  %s4, 256, %s43, [#allocation7], 128, 128, 8
    $region21: #{tpu_custom_call.1} parent=1 // pred_fallthru
      _
    // Predicated region
    $region22: #{tpu_custom_call.1} parent=1 // pred_check
      _
    $region23: #{tpu_custom_call.1} parent=1 // pred_check_branch
      %50 = sbr.rel (0) target = $region25
    $region24: #{tpu_custom_call.1} parent=1 // pred_region
      _
    $region25: #{tpu_custom_call.1} parent=1 // pred_fallthru
      _
    // Predicated region
    $region26: #{tpu_custom_call.1} parent=1 // pred_check
      _
    $region27: #{tpu_custom_call.1} parent=1 // pred_check_branch
      %52 = sbr.rel (0) target = $region29
    $region28: #{tpu_custom_call.1} parent=1 // pred_region
      %s54 = ssub.s32 512, 512
      %55 = vsyncadd [#allocation7], %s54
      %s56 = sshll.u32 [#allocation8], 4
      %s57 = int_to_ptr.vmem [resolvable:$true] %s56
      %62 = dma.hbm_to_vmem [thread:$0]  %s6, 512, %s57, [#allocation7], 128, 128, 8
    $region29: #{tpu_custom_call.1} parent=1 // pred_fallthru
      _
    // Predicated region
    $region30: #{tpu_custom_call.1} parent=1 // pred_check
      _
    $region31: #{tpu_custom_call.1} parent=1 // pred_check_branch
      %64 = sbr.rel (0) target = $region33
    $region32: #{tpu_custom_call.1} parent=1 // pred_region
      %s66 = ssub.s32 512, 512
      %67 = vsyncadd [#allocation10], %s66
      %s68 = sshll.u32 [#allocation9], 4
      %s69 = int_to_ptr.vmem [resolvable:$true] %s68
      %74 = dma.hbm_to_vmem [thread:$0]  %s7, 512, %s69, [#allocation10], 128, 128, 8
    $region33: #{tpu_custom_call.1} parent=1 // pred_fallthru
      _
    // Predicated region
    $region34: #{tpu_custom_call.1} parent=1 // pred_check
      _
    $region35: #{tpu_custom_call.1} parent=1 // pred_check_branch
      %76 = sbr.rel (0) target = $region37
    $region36: #{tpu_custom_call.1} parent=1 // pred_region
      _
    $region37: #{tpu_custom_call.1} parent=1 // pred_fallthru
      _
    // Predicated region
    $region38: #{tpu_custom_call.1} parent=1 // pred_check
      _
    $region39: #{tpu_custom_call.1} parent=1 // pred_check_branch
      %78 = sbr.rel (0) target = $region41
    $region40: #{tpu_custom_call.1} parent=1 // pred_region
      %79 = dma.done [#allocation4], 128
    $region41: #{tpu_custom_call.1} parent=1 // pred_fallthru
      _
    // Predicated region
    $region42: #{tpu_custom_call.1} parent=1 // pred_check
      _
    $region43: #{tpu_custom_call.1} parent=1 // pred_check_branch
      %81 = sbr.rel (0) target = $region45
    $region44: #{tpu_custom_call.1} parent=1 // pred_region
      %82 = dma.done [#allocation7], 256
    $region45: #{tpu_custom_call.1} parent=1 // pred_fallthru
      _
    // Predicated region
    $region46: #{tpu_custom_call.1} parent=1 // pred_check
      _
    $region47: #{tpu_custom_call.1} parent=1 // pred_check_branch
      %84 = sbr.rel (0) target = $region49
    $region48: #{tpu_custom_call.1} parent=1 // pred_region
      %85 = dma.done [#allocation7], 512
    $region49: #{tpu_custom_call.1} parent=1 // pred_fallthru
      _
    // Predicated region
    $region50: #{tpu_custom_call.1} parent=1 // pred_check
      _
    $region51: #{tpu_custom_call.1} parent=1 // pred_check_branch
      %87 = sbr.rel (0) target = $region53
    $region52: #{tpu_custom_call.1} parent=1 // pred_region
      %88 = dma.done [#allocation10], 512
    $region53: #{tpu_custom_call.1} parent=1 // pred_fallthru
      _
    %p89 = scmp.eq.s32.totalorder 0, 0
    // Predicated region
    $region54: #{tpu_custom_call.1} parent=1 // pred_check
      %p90 = pneg %p89
    $region55: #{tpu_custom_call.1} parent=1 // pred_check_branch
      %92 = sbr.rel (%p90) target = $region57
    $region56: #{tpu_custom_call.1} parent=1 // pred_region
      %vm93 = vcmask 130048
      %94 = vst.msk [vmem:[#allocation2] sm:$0xff] %vm93, 0.0
    $region57: #{tpu_custom_call.1} parent=1 // pred_fallthru
      _
    %v95 = vld [vmem:[%s2] sm:$0x1]
    %v96 = vld [vmem:[%s3] sm:$0x1]
    %v97 = vld [vmem:[%s1] sm:$0x1]
    %v98 = vlaneseq
    %v99 = vshrl.u32 %v98, 7
    %v100 = vlaneseq
    %v101 = vshrl.u32 %v100, 7
    %v102 = vsub.s32 0, %v101
    %v103 = vrot.slane %v96, %v102
    %vm104 = vcmp.eq.s32.totalorder %v99, %v103
    %v105 = vsel %vm104, 1, 0
    %v106 = vcvt.s32.f32 %v105
    %v107 = vlaneseq
    %v108 = vshrl.u32 %v107, 7
    %v109 = vsub.s32 0, %v108
    %v110 = vrot.slane %v95, %v109
    %vm111 = vcmp.eq.s32.totalorder %v99, %v110
    %v112 = vsub.f32 1.0, %v97
    %v114 = vlaneseq
    %v115 = vshrl.u32 %v114, 7
    %v116 = vsub.s32 0, %v115
    %v117 = vrot.slane %v112, %v116
    %v119 = vsel %vm111, %v117, 0.0
    %v120 = vadd.f32 %v119, %v106
    %v121 = vld [vmem:[#allocation3] sm:$0xff]
    %122 = vxpose.xlu0.b32.start [1/16] %v120, 128
    %123 = vxpose.xlu0.b32.cont [2/16] 0.0, 128
    %124 = vxpose.xlu0.b32.cont [3/16] 0.0, 128
    %125 = vxpose.xlu0.b32.cont [4/16] 0.0, 128
    %126 = vxpose.xlu0.b32.cont [5/16] 0.0, 128
    %127 = vxpose.xlu0.b32.cont [6/16] 0.0, 128
    %128 = vxpose.xlu0.b32.cont [7/16] 0.0, 128
    %129 = vxpose.xlu0.b32.cont [8/16] 0.0, 128
    %130 = vxpose.xlu0.b32.cont [9/16] 0.0, 128
    %131 = vxpose.xlu0.b32.cont [10/16] 0.0, 128
    %132 = vxpose.xlu0.b32.cont [11/16] 0.0, 128
    %133 = vxpose.xlu0.b32.cont [12/16] 0.0, 128
    %134 = vxpose.xlu0.b32.cont [13/16] 0.0, 128
    %135 = vxpose.xlu0.b32.cont [14/16] 0.0, 128
    %136 = vxpose.xlu0.b32.cont [15/16] 0.0, 128
    %137 = vxpose.xlu0.b32.end [16/16] 0.0, 128
    %v138 = vpop.trf.xlu0
    %v139 = vpop.trf.xlu0
    %v140 = vpop.trf.xlu0
    %v141 = vpop.trf.xlu0
    %v142 = vpop.trf.xlu0
    %v143 = vpop.trf.xlu0
    %v144 = vpop.trf.xlu0
    %v145 = vpop.trf.xlu0
    %v146 = vpop.trf.xlu0
    %v147 = vpop.trf.xlu0
    %v148 = vpop.trf.xlu0
    %v149 = vpop.trf.xlu0
    %v150 = vpop.trf.xlu0
    %v151 = vpop.trf.xlu0
    %v152 = vpop.trf.xlu0
    %v153 = vpop.trf.xlu0
    %vm154 = vcmask 64512
    %v156 = vsel %vm154, %v138, 0
    %v159 = vsel %vm154, %v139, 0
    %v162 = vsel %vm154, %v140, 0
    %v165 = vsel %vm154, %v141, 0
    %v168 = vsel %vm154, %v142, 0
    %v171 = vsel %vm154, %v143, 0
    %v174 = vsel %vm154, %v144, 0
    %v177 = vsel %vm154, %v145, 0
    %v180 = vsel %vm154, %v146, 0
    %v183 = vsel %vm154, %v147, 0
    %v186 = vsel %vm154, %v148, 0
    %v189 = vsel %vm154, %v149, 0
    %v192 = vsel %vm154, %v150, 0
    %v195 = vsel %vm154, %v151, 0
    %v198 = vsel %vm154, %v152, 0
    %v201 = vsel %vm154, %v153, 0
    %203 = vmatprep.subr.mxu0 0.0
    %204 = vmatpush1.msra.mxu0 %v121
    %205 = vmatprep.subr.mxu0 0.0
    %206 = vmatpush1.msra.mxu0 0.0
    %207 = vmatprep.subr.mxu0 0.0
    %208 = vmatpush1.msra.mxu0 0.0
    %209 = vmatprep.subr.mxu0 0.0
    %210 = vmatpush1.msra.mxu0 0.0
    %211 = vmatprep.subr.mxu0 0.0
    %212 = vmatpush1.msra.mxu0 0.0
    %213 = vmatprep.subr.mxu0 0.0
    %214 = vmatpush1.msra.mxu0 0.0
    %215 = vmatprep.subr.mxu0 0.0
    %216 = vmatpush1.msra.mxu0 0.0
    %217 = vmatprep.subr.mxu0 0.0
    %218 = vmatpush1.msra.mxu0 0.0
    %219 = vmatprep.subr.mxu0 0.0
    %220 = vmatpush1.msra.mxu0 0.0
    %221 = vmatprep.subr.mxu0 0.0
    %222 = vmatpush1.msra.mxu0 0.0
    %223 = vmatprep.subr.mxu0 0.0
    %224 = vmatpush1.msra.mxu0 0.0
    %225 = vmatprep.subr.mxu0 0.0
    %226 = vmatpush1.msra.mxu0 0.0
    %227 = vmatprep.subr.mxu0 0.0
    %228 = vmatpush1.msra.mxu0 0.0
    %229 = vmatprep.subr.mxu0 0.0
    %230 = vmatpush1.msra.mxu0 0.0
    %231 = vmatprep.subr.mxu0 0.0
    %232 = vmatpush1.msra.mxu0 0.0
    %233 = vmatprep.subr.mxu0 0.0
    %234 = vmatpush1.msra.mxu0 0.0
    %235 = vmatprep.subr.mxu0 0.0
    %236 = vmatpush1.msra.mxu0 0.0
    %237 = vmatprep.subr.mxu0 0.0
    %238 = vmatpush1.msra.mxu0 0.0
    %239 = vmatprep.subr.mxu0 0.0
    %240 = vmatpush1.msra.mxu0 0.0
    %241 = vmatprep.subr.mxu0 0.0
    %242 = vmatpush1.msra.mxu0 0.0
    %243 = vmatprep.subr.mxu0 0.0
    %244 = vmatpush1.msra.mxu0 0.0
    %245 = vmatprep.subr.mxu0 0.0
    %246 = vmatpush1.msra.mxu0 0.0
    %247 = vmatprep.subr.mxu0 0.0
    %248 = vmatpush1.msra.mxu0 0.0
    %249 = vmatprep.subr.mxu0 0.0
    %250 = vmatpush1.msra.mxu0 0.0
    %251 = vmatprep.subr.mxu0 0.0
    %252 = vmatpush1.msra.mxu0 0.0
    %253 = vmatprep.subr.mxu0 0.0
    %254 = vmatpush1.msra.mxu0 0.0
    %255 = vmatprep.subr.mxu0 0.0
    %256 = vmatpush1.msra.mxu0 0.0
    %257 = vmatprep.subr.mxu0 0.0
    %258 = vmatpush1.msra.mxu0 0.0
    %259 = vmatprep.subr.mxu0 0.0
    %260 = vmatpush1.msra.mxu0 0.0
    %261 = vmatprep.subr.mxu0 0.0
    %262 = vmatpush1.msra.mxu0 0.0
    %263 = vmatprep.subr.mxu0 0.0
    %264 = vmatpush1.msra.mxu0 0.0
    %265 = vmatprep.subr.mxu0 0.0
    %266 = vmatpush1.msra.mxu0 0.0
    %267 = vmatprep.mubr.f32.mxu0 0.0
    %268 = vmatmul.mubr.f32.gmra.mrb[0].mxu0 %v156
    %v269 = vpop.f32.mrb[0].mxu0
    %v270 = vadd.f32 0.0, %v269
    %v271 = vpop.f32.mrb[0].mxu0
    %272 = vmatprep.mubr.f32.mxu0 0.0
    %273 = vmatmul.mubr.f32.gmra.mrb[0].mxu0 %v159
    %v274 = vpop.f32.mrb[0].mxu0
    %v275 = vadd.f32 0.0, %v274
    %v276 = vpop.f32.mrb[0].mxu0
    %277 = vmatprep.mubr.f32.mxu0 0.0
    %278 = vmatmul.mubr.f32.gmra.mrb[0].mxu0 %v162
    %v279 = vpop.f32.mrb[0].mxu0
    %v280 = vadd.f32 0.0, %v279
    %v281 = vpop.f32.mrb[0].mxu0
    %282 = vmatprep.mubr.f32.mxu0 0.0
    %283 = vmatmul.mubr.f32.gmra.mrb[0].mxu0 %v165
    %v284 = vpop.f32.mrb[0].mxu0
    %v285 = vadd.f32 0.0, %v284
    %v286 = vpop.f32.mrb[0].mxu0
    %287 = vmatprep.mubr.f32.mxu0 0.0
    %288 = vmatmul.mubr.f32.gmra.mrb[0].mxu0 %v168
    %v289 = vpop.f32.mrb[0].mxu0
    %v290 = vadd.f32 0.0, %v289
    %v291 = vpop.f32.mrb[0].mxu0
    %292 = vmatprep.mubr.f32.mxu0 0.0
    %293 = vmatmul.mubr.f32.gmra.mrb[0].mxu0 %v171
    %v294 = vpop.f32.mrb[0].mxu0
    %v295 = vadd.f32 0.0, %v294
    %v296 = vpop.f32.mrb[0].mxu0
    %297 = vmatprep.mubr.f32.mxu0 0.0
    %298 = vmatmul.mubr.f32.gmra.mrb[0].mxu0 %v174
    %v299 = vpop.f32.mrb[0].mxu0
    %v300 = vadd.f32 0.0, %v299
    %v301 = vpop.f32.mrb[0].mxu0
    %302 = vmatprep.mubr.f32.mxu0 0.0
    %303 = vmatmul.mubr.f32.gmra.mrb[0].mxu0 %v177
    %v304 = vpop.f32.mrb[0].mxu0
    %v305 = vadd.f32 0.0, %v304
    %v306 = vpop.f32.mrb[0].mxu0
    %307 = vmatprep.mubr.f32.mxu0 0.0
    %308 = vmatmul.mubr.f32.gmra.mrb[0].mxu0 %v180
    %v309 = vpop.f32.mrb[0].mxu0
    %v310 = vadd.f32 0.0, %v309
    %v311 = vpop.f32.mrb[0].mxu0
    %312 = vmatprep.mubr.f32.mxu0 0.0
    %313 = vmatmul.mubr.f32.gmra.mrb[0].mxu0 %v183
    %v314 = vpop.f32.mrb[0].mxu0
    %v315 = vadd.f32 0.0, %v314
    %v316 = vpop.f32.mrb[0].mxu0
    %317 = vmatprep.mubr.f32.mxu0 0.0
    %318 = vmatmul.mubr.f32.gmra.mrb[0].mxu0 %v186
    %v319 = vpop.f32.mrb[0].mxu0
    %v320 = vadd.f32 0.0, %v319
    %v321 = vpop.f32.mrb[0].mxu0
    %322 = vmatprep.mubr.f32.mxu0 0.0
    %323 = vmatmul.mubr.f32.gmra.mrb[0].mxu0 %v189
    %v324 = vpop.f32.mrb[0].mxu0
    %v325 = vadd.f32 0.0, %v324
    %v326 = vpop.f32.mrb[0].mxu0
    %327 = vmatprep.mubr.f32.mxu0 0.0
    %328 = vmatmul.mubr.f32.gmra.mrb[0].mxu0 %v192
    %v329 = vpop.f32.mrb[0].mxu0
    %v330 = vadd.f32 0.0, %v329
    %v331 = vpop.f32.mrb[0].mxu0
    %332 = vmatprep.mubr.f32.mxu0 0.0
    %333 = vmatmul.mubr.f32.gmra.mrb[0].mxu0 %v195
    %v334 = vpop.f32.mrb[0].mxu0
    %v335 = vadd.f32 0.0, %v334
    %v336 = vpop.f32.mrb[0].mxu0
    %337 = vmatprep.mubr.f32.mxu0 0.0
    %338 = vmatmul.mubr.f32.gmra.mrb[0].mxu0 %v198
    %v339 = vpop.f32.mrb[0].mxu0
    %v340 = vadd.f32 0.0, %v339
    %v341 = vpop.f32.mrb[0].mxu0
    %342 = vmatprep.mubr.f32.mxu0 0.0
    %343 = vmatmul.mubr.f32.gmra.mrb[0].mxu0 %v201
    %v344 = vpop.f32.mrb[0].mxu0
    %v345 = vadd.f32 0.0, %v344
    %v346 = vpop.f32.mrb[0].mxu0
    %347 = vdwg.mxu0
    %v348 = vld [vmem:[#allocation2] sm:$0xff]
    %349 = vmatprep.subr.mxu0 0.0
    %350 = vmatpush1.msra.mxu0 %v270
    %351 = vmatprep.subr.mxu0 0.0
    %352 = vmatpush1.msra.mxu0 %v275
    %353 = vmatprep.subr.mxu0 0.0
    %354 = vmatpush1.msra.mxu0 %v280
    %355 = vmatprep.subr.mxu0 0.0
    %356 = vmatpush1.msra.mxu0 %v285
    %357 = vmatprep.subr.mxu0 0.0
    %358 = vmatpush1.msra.mxu0 %v290
    %359 = vmatprep.subr.mxu0 0.0
    %360 = vmatpush1.msra.mxu0 %v295
    %361 = vmatprep.subr.mxu0 0.0
    %362 = vmatpush1.msra.mxu0 %v300
    %363 = vmatprep.subr.mxu0 0.0
    %364 = vmatpush1.msra.mxu0 %v305
    %365 = vmatprep.subr.mxu0 0.0
    %366 = vmatpush1.msra.mxu0 %v310
    %367 = vmatprep.subr.mxu0 0.0
    %368 = vmatpush1.msra.mxu0 %v315
    %369 = vmatprep.subr.mxu0 0.0
    %370 = vmatpush1.msra.mxu0 %v320
    %371 = vmatprep.subr.mxu0 0.0
    %372 = vmatpush1.msra.mxu0 %v325
    %373 = vmatprep.subr.mxu0 0.0
    %374 = vmatpush1.msra.mxu0 %v330
    %375 = vmatprep.subr.mxu0 0.0
    %376 = vmatpush1.msra.mxu0 %v335
    %377 = vmatprep.subr.mxu0 0.0
    %378 = vmatpush1.msra.mxu0 %v340
    %379 = vmatprep.subr.mxu0 0.0
    %380 = vmatpush1.msra.mxu0 %v345
    %381 = vmatprep.subr.mxu0 0.0
    %382 = vmatpush1.msra.mxu0 0.0
    %383 = vmatprep.subr.mxu0 0.0
    %384 = vmatpush1.msra.mxu0 0.0
    %385 = vmatprep.subr.mxu0 0.0
    %386 = vmatpush1.msra.mxu0 0.0
    %387 = vmatprep.subr.mxu0 0.0
    %388 = vmatpush1.msra.mxu0 0.0
    %389 = vmatprep.subr.mxu0 0.0
    %390 = vmatpush1.msra.mxu0 0.0
    %391 = vmatprep.subr.mxu0 0.0
    %392 = vmatpush1.msra.mxu0 0.0
    %393 = vmatprep.subr.mxu0 0.0
    %394 = vmatpush1.msra.mxu0 0.0
    %395 = vmatprep.subr.mxu0 0.0
    %396 = vmatpush1.msra.mxu0 0.0
    %397 = vmatprep.subr.mxu0 0.0
    %398 = vmatpush1.msra.mxu0 0.0
    %399 = vmatprep.subr.mxu0 0.0
    %400 = vmatpush1.msra.mxu0 0.0
    %401 = vmatprep.subr.mxu0 0.0
    %402 = vmatpush1.msra.mxu0 0.0
    %403 = vmatprep.subr.mxu0 0.0
    %404 = vmatpush1.msra.mxu0 0.0
    %405 = vmatprep.subr.mxu0 0.0
    %406 = vmatpush1.msra.mxu0 0.0
    %407 = vmatprep.subr.mxu0 0.0
    %408 = vmatpush1.msra.mxu0 0.0
    %409 = vmatprep.subr.mxu0 0.0
    %410 = vmatpush1.msra.mxu0 0.0
    %411 = vmatprep.subr.mxu0 0.0
    %412 = vmatpush1.msra.mxu0 0.0
    %413 = vmatprep.mubr.f32.mxu0 0.0
    %414 = vmatmul.mubr.f32.gmra.mrb[0].mxu0 %v106
    %v415 = vpop.f32.mrb[0].mxu0
    %v416 = vadd.f32 0.0, %v415
    %v417 = vpop.f32.mrb[0].mxu0
    %418 = vdwg.mxu0
    %v419 = vadd.f32 %v348, %v416
    %vm420 = vcmask 130048
    %421 = vst.msk [vmem:[#allocation2] sm:$0xff] %vm420, %v419
    // Predicated region
    $region58: #{tpu_custom_call.1} parent=1 // pred_check
      %p422 = pneg %p89
    $region59: #{tpu_custom_call.1} parent=1 // pred_check_branch
      %424 = sbr.rel (%p422) target = $region61
    $region60: #{tpu_custom_call.1} parent=1 // pred_region
      %v425 = vld [vmem:[#allocation2] sm:$0xff]
      %v426 = vld [vmem:[#allocation6] sm:$0xff]
      %v427 = vld [vmem:[#allocation6 + $0x8] sm:$0xff]
      %v428 = vld [vmem:[%s5] sm:$0x1]
      %v430 = vlaneseq
      %v431 = vshrl.u32 %v430, 7
      %v432 = vsub.s32 0, %v431
      %v433 = vrot.slane %v428, %v432
      %v436 = vsel %vm420, %v425, 0
      %438 = vmatprep.subr.mxu0 0.0
      %439 = vmatpush1.msra.mxu0 %v426
      %440 = vmatprep.subr.mxu0 0.0
      %441 = vmatpush1.msra.mxu0 %v427
      %442 = vmatprep.subr.mxu0 0.0
      %443 = vmatpush1.msra.mxu0 0.0
      %444 = vmatprep.subr.mxu0 0.0
      %445 = vmatpush1.msra.mxu0 0.0
      %446 = vmatprep.subr.mxu0 0.0
      %447 = vmatpush1.msra.mxu0 0.0
      %448 = vmatprep.subr.mxu0 0.0
      %449 = vmatpush1.msra.mxu0 0.0
      %450 = vmatprep.subr.mxu0 0.0
      %451 = vmatpush1.msra.mxu0 0.0
      %452 = vmatprep.subr.mxu0 0.0
      %453 = vmatpush1.msra.mxu0 0.0
      %454 = vmatprep.subr.mxu0 0.0
      %455 = vmatpush1.msra.mxu0 0.0
      %456 = vmatprep.subr.mxu0 0.0
      %457 = vmatpush1.msra.mxu0 0.0
      %458 = vmatprep.subr.mxu0 0.0
      %459 = vmatpush1.msra.mxu0 0.0
      %460 = vmatprep.subr.mxu0 0.0
      %461 = vmatpush1.msra.mxu0 0.0
      %462 = vmatprep.subr.mxu0 0.0
      %463 = vmatpush1.msra.mxu0 0.0
      %464 = vmatprep.subr.mxu0 0.0
      %465 = vmatpush1.msra.mxu0 0.0
      %466 = vmatprep.subr.mxu0 0.0
      %467 = vmatpush1.msra.mxu0 0.0
      %468 = vmatprep.subr.mxu0 0.0
      %469 = vmatpush1.msra.mxu0 0.0
      %470 = vmatprep.subr.mxu0 0.0
      %471 = vmatpush1.msra.mxu0 0.0
      %472 = vmatprep.subr.mxu0 0.0
      %473 = vmatpush1.msra.mxu0 0.0
      %474 = vmatprep.subr.mxu0 0.0
      %475 = vmatpush1.msra.mxu0 0.0
      %476 = vmatprep.subr.mxu0 0.0
      %477 = vmatpush1.msra.mxu0 0.0
      %478 = vmatprep.subr.mxu0 0.0
      %479 = vmatpush1.msra.mxu0 0.0
      %480 = vmatprep.subr.mxu0 0.0
      %481 = vmatpush1.msra.mxu0 0.0
      %482 = vmatprep.subr.mxu0 0.0
      %483 = vmatpush1.msra.mxu0 0.0
      %484 = vmatprep.subr.mxu0 0.0
      %485 = vmatpush1.msra.mxu0 0.0
      %486 = vmatprep.subr.mxu0 0.0
      %487 = vmatpush1.msra.mxu0 0.0
      %488 = vmatprep.subr.mxu0 0.0
      %489 = vmatpush1.msra.mxu0 0.0
      %490 = vmatprep.subr.mxu0 0.0
      %491 = vmatpush1.msra.mxu0 0.0
      %492 = vmatprep.subr.mxu0 0.0
      %493 = vmatpush1.msra.mxu0 0.0
      %494 = vmatprep.subr.mxu0 0.0
      %495 = vmatpush1.msra.mxu0 0.0
      %496 = vmatprep.subr.mxu0 0.0
      %497 = vmatpush1.msra.mxu0 0.0
      %498 = vmatprep.subr.mxu0 0.0
      %499 = vmatpush1.msra.mxu0 0.0
      %500 = vmatprep.subr.mxu0 0.0
      %501 = vmatpush1.msra.mxu0 0.0
      %502 = vmatprep.mubr.f32.mxu0 0.0
      %503 = vmatmul.mubr.f32.gmra.mrb[0].mxu0 %v436
      %v504 = vpop.f32.mrb[0].mxu0
      %v505 = vadd.f32 %v433, %v504
      %v506 = vpop.f32.mrb[0].mxu0
      %507 = vdwg.mxu0
      %v508 = vmax.f32 %v505, 0.0
      %v509 = vld [vmem:[#allocation8] sm:$0xff]
      %v510 = vld [vmem:[#allocation8 + $0x8] sm:$0xff]
      %v511 = vld [vmem:[#allocation8 + $0x10] sm:$0xff]
      %v512 = vld [vmem:[#allocation8 + $0x18] sm:$0xff]
      %vm513 = vcmask 261120
      %v515 = vsel %vm513, %v508, 0
      %517 = vmatprep.subr.mxu0 0.0
      %518 = vmatpush1.msra.mxu0 %v509
      %519 = vmatprep.subr.mxu0 0.0
      %520 = vmatpush1.msra.mxu0 %v510
      %521 = vmatprep.subr.mxu0 0.0
      %522 = vmatpush1.msra.mxu0 %v511
      %523 = vmatprep.subr.mxu0 0.0
      %524 = vmatpush1.msra.mxu0 %v512
      %525 = vmatprep.subr.mxu0 0.0
      %526 = vmatpush1.msra.mxu0 0.0
      %527 = vmatprep.subr.mxu0 0.0
      %528 = vmatpush1.msra.mxu0 0.0
      %529 = vmatprep.subr.mxu0 0.0
      %530 = vmatpush1.msra.mxu0 0.0
      %531 = vmatprep.subr.mxu0 0.0
      %532 = vmatpush1.msra.mxu0 0.0
      %533 = vmatprep.subr.mxu0 0.0
      %534 = vmatpush1.msra.mxu0 0.0
      %535 = vmatprep.subr.mxu0 0.0
      %536 = vmatpush1.msra.mxu0 0.0
      %537 = vmatprep.subr.mxu0 0.0
      %538 = vmatpush1.msra.mxu0 0.0
      %539 = vmatprep.subr.mxu0 0.0
      %540 = vmatpush1.msra.mxu0 0.0
      %541 = vmatprep.subr.mxu0 0.0
      %542 = vmatpush1.msra.mxu0 0.0
      %543 = vmatprep.subr.mxu0 0.0
      %544 = vmatpush1.msra.mxu0 0.0
      %545 = vmatprep.subr.mxu0 0.0
      %546 = vmatpush1.msra.mxu0 0.0
      %547 = vmatprep.subr.mxu0 0.0
      %548 = vmatpush1.msra.mxu0 0.0
      %549 = vmatprep.subr.mxu0 0.0
      %550 = vmatpush1.msra.mxu0 0.0
      %551 = vmatprep.subr.mxu0 0.0
      %552 = vmatpush1.msra.mxu0 0.0
      %553 = vmatprep.subr.mxu0 0.0
      %554 = vmatpush1.msra.mxu0 0.0
      %555 = vmatprep.subr.mxu0 0.0
      %556 = vmatpush1.msra.mxu0 0.0
      %557 = vmatprep.subr.mxu0 0.0
      %558 = vmatpush1.msra.mxu0 0.0
      %559 = vmatprep.subr.mxu0 0.0
      %560 = vmatpush1.msra.mxu0 0.0
      %561 = vmatprep.subr.mxu0 0.0
      %562 = vmatpush1.msra.mxu0 0.0
      %563 = vmatprep.subr.mxu0 0.0
      %564 = vmatpush1.msra.mxu0 0.0
      %565 = vmatprep.subr.mxu0 0.0
      %566 = vmatpush1.msra.mxu0 0.0
      %567 = vmatprep.subr.mxu0 0.0
      %568 = vmatpush1.msra.mxu0 0.0
      %569 = vmatprep.subr.mxu0 0.0
      %570 = vmatpush1.msra.mxu0 0.0
      %571 = vmatprep.subr.mxu0 0.0
      %572 = vmatpush1.msra.mxu0 0.0
      %573 = vmatprep.subr.mxu0 0.0
      %574 = vmatpush1.msra.mxu0 0.0
      %575 = vmatprep.subr.mxu0 0.0
      %576 = vmatpush1.msra.mxu0 0.0
      %577 = vmatprep.subr.mxu0 0.0
      %578 = vmatpush1.msra.mxu0 0.0
      %579 = vmatprep.subr.mxu0 0.0
      %580 = vmatpush1.msra.mxu0 0.0
      %581 = vmatprep.mubr.f32.mxu0 0.0
      %582 = vmatmul.mubr.f32.gmra.mrb[0].mxu0 %v515
      %v583 = vpop.f32.mrb[0].mxu0
      %v584 = vadd.f32 0.0, %v583
      %v585 = vpop.f32.mrb[0].mxu0
      %586 = vdwg.mxu0
      %587 = vst [vmem:[#allocation11] sm:$0xff] %v584
      %v588 = vld [vmem:[#allocation9] sm:$0xff]
      %v589 = vld [vmem:[#allocation9 + $0x8] sm:$0xff]
      %v590 = vld [vmem:[#allocation9 + $0x10] sm:$0xff]
      %v591 = vld [vmem:[#allocation9 + $0x18] sm:$0xff]
      %v592 = vld [vmem:[%s8] sm:$0x1]
      %v594 = vlaneseq
      %v595 = vshrl.u32 %v594, 7
      %v596 = vsub.s32 0, %v595
      %v597 = vrot.slane %v592, %v596
      %599 = vmatprep.subr.mxu0 0.0
      %600 = vmatpush1.msra.mxu0 %v588
      %601 = vmatprep.subr.mxu0 0.0
      %602 = vmatpush1.msra.mxu0 %v589
      %603 = vmatprep.subr.mxu0 0.0
      %604 = vmatpush1.msra.mxu0 %v590
      %605 = vmatprep.subr.mxu0 0.0
      %606 = vmatpush1.msra.mxu0 %v591
      %607 = vmatprep.subr.mxu0 0.0
      %608 = vmatpush1.msra.mxu0 0.0
      %609 = vmatprep.subr.mxu0 0.0
      %610 = vmatpush1.msra.mxu0 0.0
      %611 = vmatprep.subr.mxu0 0.0
      %612 = vmatpush1.msra.mxu0 0.0
      %613 = vmatprep.subr.mxu0 0.0
      %614 = vmatpush1.msra.mxu0 0.0
      %615 = vmatprep.subr.mxu0 0.0
      %616 = vmatpush1.msra.mxu0 0.0
      %617 = vmatprep.subr.mxu0 0.0
      %618 = vmatpush1.msra.mxu0 0.0
      %619 = vmatprep.subr.mxu0 0.0
      %620 = vmatpush1.msra.mxu0 0.0
      %621 = vmatprep.subr.mxu0 0.0
      %622 = vmatpush1.msra.mxu0 0.0
      %623 = vmatprep.subr.mxu0 0.0
      %624 = vmatpush1.msra.mxu0 0.0
      %625 = vmatprep.subr.mxu0 0.0
      %626 = vmatpush1.msra.mxu0 0.0
      %627 = vmatprep.subr.mxu0 0.0
      %628 = vmatpush1.msra.mxu0 0.0
      %629 = vmatprep.subr.mxu0 0.0
      %630 = vmatpush1.msra.mxu0 0.0
      %631 = vmatprep.subr.mxu0 0.0
      %632 = vmatpush1.msra.mxu0 0.0
      %633 = vmatprep.subr.mxu0 0.0
      %634 = vmatpush1.msra.mxu0 0.0
      %635 = vmatprep.subr.mxu0 0.0
      %636 = vmatpush1.msra.mxu0 0.0
      %637 = vmatprep.subr.mxu0 0.0
      %638 = vmatpush1.msra.mxu0 0.0
      %639 = vmatprep.subr.mxu0 0.0
      %640 = vmatpush1.msra.mxu0 0.0
      %641 = vmatprep.subr.mxu0 0.0
      %642 = vmatpush1.msra.mxu0 0.0
      %643 = vmatprep.subr.mxu0 0.0
      %644 = vmatpush1.msra.mxu0 0.0
      %645 = vmatprep.subr.mxu0 0.0
      %646 = vmatpush1.msra.mxu0 0.0
      %647 = vmatprep.subr.mxu0 0.0
      %648 = vmatpush1.msra.mxu0 0.0
      %649 = vmatprep.subr.mxu0 0.0
      %650 = vmatpush1.msra.mxu0 0.0
      %651 = vmatprep.subr.mxu0 0.0
      %652 = vmatpush1.msra.mxu0 0.0
      %653 = vmatprep.subr.mxu0 0.0
      %654 = vmatpush1.msra.mxu0 0.0
      %655 = vmatprep.subr.mxu0 0.0
      %656 = vmatpush1.msra.mxu0 0.0
      %657 = vmatprep.subr.mxu0 0.0
      %658 = vmatpush1.msra.mxu0 0.0
      %659 = vmatprep.subr.mxu0 0.0
      %660 = vmatpush1.msra.mxu0 0.0
      %661 = vmatprep.subr.mxu0 0.0
      %662 = vmatpush1.msra.mxu0 0.0
      %663 = vmatprep.mubr.f32.mxu0 0.0
      %664 = vmatmul.mubr.f32.gmra.mrb[0].mxu0 %v515
      %v665 = vpop.f32.mrb[0].mxu0
      %v666 = vadd.f32 %v597, %v665
      %v667 = vpop.f32.mrb[0].mxu0
      %668 = vdwg.mxu0
      %669 = vst [vmem:[#allocation12] sm:$0xff] %v666
    $region61: #{tpu_custom_call.1} parent=1 // pred_fallthru
      _
    // Predicated region
    $region62: #{tpu_custom_call.1} parent=1 // pred_check
      _
    $region63: #{tpu_custom_call.1} parent=1 // pred_check_branch
      %671 = sbr.rel (0) target = $region65
    $region64: #{tpu_custom_call.1} parent=1 // pred_region
      %s673 = ssub.s32 128, 128
      %674 = vsyncadd [#allocation5], %s673
      %s676 = sshll.u32 [#allocation11], 4
      %s677 = int_to_ptr.vmem [resolvable:$true] %s676
      %679 = dma.vmem_to_hbm [thread:$0]  %s677, 128, %s9, [#allocation5]
    $region65: #{tpu_custom_call.1} parent=1 // pred_fallthru
      _
    // Predicated region
    $region66: #{tpu_custom_call.1} parent=1 // pred_check
      _
    $region67: #{tpu_custom_call.1} parent=1 // pred_check_branch
      %681 = sbr.rel (0) target = $region69
    $region68: #{tpu_custom_call.1} parent=1 // pred_region
      %s683 = ssub.s32 128, 128
      %684 = vsyncadd [#allocation13], %s683
      %s686 = sshll.u32 [#allocation12], 4
      %s687 = int_to_ptr.vmem [resolvable:$true] %s686
      %689 = dma.vmem_to_hbm [thread:$0]  %s687, 128, %s10, [#allocation13]
    $region69: #{tpu_custom_call.1} parent=1 // pred_fallthru
      _
    // Predicated region
    $region70: #{tpu_custom_call.1} parent=1 // pred_check
      _
    $region71: #{tpu_custom_call.1} parent=1 // pred_check_branch
      %691 = sbr.rel (0) target = $region73
    $region72: #{tpu_custom_call.1} parent=1 // pred_region
      %692 = dma.done [#allocation5], 128
    $region73: #{tpu_custom_call.1} parent=1 // pred_fallthru
      _
    // Predicated region
    $region74: #{tpu_custom_call.1} parent=1 // pred_check
      _
    $region75: #{tpu_custom_call.1} parent=1 // pred_check_branch
      %694 = sbr.rel (0) target = $region77
    $region76: #{tpu_custom_call.1} parent=1 // pred_region
      %695 = dma.done [#allocation13], 128
    $region77: #{tpu_custom_call.1} parent=1 // pred_fallthru
      _
    %696 = vsyncpa [#allocation4], 1
    %697 = vsyncpa [#allocation7], 1
    %698 = vsyncpa [#allocation10], 1
    %699 = vsyncpa [#allocation5], 1
    %700 = vsyncpa [#allocation13], 1

</llo_original>
